<compile_context>
chip_gen: v7x
topology: tpu7x:2x2x1
jax: 0.10.0
libtpu: 0.0.40
codegen_flags: <defaults>
</compile_context>

<pallas_src>
import jax
import jax.numpy as jnp
from jax.experimental import pallas as pl
from jax.experimental.pallas import tpu as pltpu


def _group_max_kernel(x_ref, o_ref):
    # x_ref: (TB, G, TR, TL) VMEM tile; o_ref: (TB, TR, TL).
    # G sits on neither the sublane nor the lane axis -> pure elementwise VPU vmax.
    o_ref[...] = jnp.max(x_ref[...], axis=1)


def _round_down(x, m):
    return (x // m) * m


def _vmem_budget():
    """Generation-aware (target_block_bytes, vmem_limit_bytes, vmem_capacity)."""
    cap = 64 * 1024 * 1024  # conservative default = v7x physical VMEM
    try:
        cap = int(pltpu.get_tpu_info().vmem_capacity_bytes)
    except Exception:
        pass
    # ~1/8 of VMEM per input block: ~8 MiB on v7x (64 MiB), ~16 MiB on v5e/v6e (128 MiB).
    target = max(2 * 1024 * 1024, cap // 8)
    # Explicit scoped-VMEM limit well above the 16/32/32 MiB defaults, with headroom.
    limit = min(cap * 3 // 4, 64 * 1024 * 1024)
    return target, limit, cap


def _largest_lane_divisor(m, cap):
    """Largest multiple of 128 dividing m (m % 128 == 0) that is <= cap."""
    q = m // 128
    for d in range(max(1, min(q, cap // 128)), 0, -1):
        if q % d == 0:
            return 128 * d
    return 128


def _pick_tiles(batch, group_size, rows, lanes, itemsize, target_bytes):
    """Pick (tile_b, tile_r, tile_l): lane-dense blocks of ~target_bytes."""
    sub_mult = 8 if itemsize >= 4 else 32 // itemsize

    # Lanes: full rows unless even a minimal-sublane row block busts the budget.
    min_row_block = group_size * sub_mult * lanes * itemsize
    if lanes % 128 == 0 and min_row_block > target_bytes:
        tile_l = max(128, _round_down(target_bytes // (group_size * sub_mult * itemsize), 128))
        tile_l = min(tile_l, lanes)
    else:
        tile_l = lanes

    # Sublanes (rows): fill the remaining byte budget; ragged tail blocks are masked.
    max_r = max(1, target_bytes // (group_size * tile_l * itemsize))
    if rows <= max_r:
        tile_r = rows
    else:
        tile_r = max(sub_mult, _round_down(min(max_r, rows), sub_mult))

    # Batch: when a full per-batch slab is small, pack several slabs per step.
    tile_b = 1
    if tile_r == rows and tile_l == lanes:
        slab = group_size * rows * lanes * itemsize
        tile_b = int(min(batch, max(1, target_bytes // max(1, slab))))
        # Keep >= 2 grid steps for v7x megacore when there is non-trivial work.
        if tile_b == batch and batch > 1 and batch * slab > 2 * 1024 * 1024:
            tile_b = (batch + 1) // 2
    return tile_b, tile_r, tile_l


def group_max_projection(x, group_size=4):
    """x: (B, C, H, W) -> (B, C // group_size, H, W), max over channel groups."""
    B, C, H, W = x.shape
    assert C % group_size == 0, "channels must be divisible by group_size"
    c_sub = C // group_size
    n = H * W
    m = c_sub * n
    itemsize = jnp.dtype(x.dtype).itemsize
    target_bytes, vmem_limit, vmem_cap = _vmem_budget()
    sub_mult = 8 if itemsize >= 4 else 32 // itemsize

    # Choose a lane-dense (R, L) factorization of the per-(b, g) slab.  The max
    # over G is position-independent, so re-factoring the contiguous trailing
    # c_sub*H*W elements is a metadata-only reshape with identical semantics.
    if n % 128 == 0:
        R, L = c_sub, n                          # natural split, already lane-dense
    elif m % 128 == 0:
        lane_cap = max(128, target_bytes // (group_size * sub_mult * itemsize))
        L = _largest_lane_divisor(m, lane_cap)
        R = m // L
    else:
        # TODO(synk): c_sub*H*W not a multiple of 128 -> masked tail stores remain.
        R, L = c_sub, n

    x_r = x.reshape(B, group_size, R, L)         # metadata-only reshape

    tile_b, tile_r, tile_l = _pick_tiles(B, group_size, R, L, itemsize, target_bytes)
    grid = (pl.cdiv(B, tile_b), pl.cdiv(R, tile_r), pl.cdiv(L, tile_l))

    # VMEM-padded per-block footprint (double-buffered input + output).
    pad_r = -(-tile_r // sub_mult) * sub_mult
    pad_l = -(-tile_l // 128) * 128
    in_blk = tile_b * group_size * pad_r * pad_l * itemsize
    out_blk = tile_b * pad_r * pad_l * itemsize
    needed = 2 * (in_blk + out_blk) + (2 << 20)
    vmem_limit = int(min(max(vmem_limit, needed), max(needed, vmem_cap * 7 // 8)))

    cost = pl.CostEstimate(
        flops=B * group_size * m,                               # ~G compares per output elem
        transcendentals=0,
        bytes_accessed=(group_size + 1) * B * m * itemsize,
    )

    out = pl.pallas_call(
        _group_max_kernel,
        out_shape=jax.ShapeDtypeStruct((B, R, L), x.dtype),
        grid_spec=pltpu.PrefetchScalarGridSpec(
            num_scalar_prefetch=0,
            grid=grid,
            in_specs=[
                pl.BlockSpec(
                    (tile_b, group_size, tile_r, tile_l),
                    lambda b, r, l: (b, 0, r, l),
                ),
            ],
            out_specs=pl.BlockSpec(
                (tile_b, tile_r, tile_l),
                lambda b, r, l: (b, r, l),
            ),
        ),
        compiler_params=pltpu.CompilerParams(
            dimension_semantics=("parallel", "parallel", "parallel"),
            vmem_limit_bytes=vmem_limit,
        ),
        cost_estimate=cost,
    )(x_r)

    # metadata-only reshape back to NCHW
    return out.reshape(B, c_sub, H, W)


if __name__ == "__main__":
    key = jax.random.PRNGKey(0)
    group_size = 4

    # Small shape consistent with the module's forward (NCHW).
    B, C, H, W = 2, 4, 16, 16
    x = jax.random.normal(key, (B, C, H, W), dtype=jnp.float32)
    out = jax.block_until_ready(group_max_projection(x, group_size=group_size))
    ref = jnp.max(x.reshape(B, group_size, C // group_size, H, W), axis=1)
    assert out.shape == (B, C // group_size, H, W)
    assert jnp.allclose(out, ref), "mismatch vs reference (base shape)"

    # Lane-dense natural layout (n = H*W = 1024, multiple of 128).
    k1 = jax.random.PRNGKey(1)
    B2, C2, H2, W2 = 2, 64, 32, 32
    x2 = jax.random.normal(k1, (B2, C2, H2, W2), dtype=jnp.float32)
    out2 = jax.block_until_ready(group_max_projection(x2, group_size=group_size))
    ref2 = jnp.max(x2.reshape(B2, group_size, C2 // group_size, H2, W2), axis=1)
    assert jnp.allclose(out2, ref2), "mismatch vs reference (tiled shape)"

    # Spatial size not a multiple of 128 but c_sub*H*W is -> flattened lane-dense layout.
    k2 = jax.random.PRNGKey(2)
    B3, C3, H3, W3 = 2, 32, 20, 20
    x3 = jax.random.normal(k2, (B3, C3, H3, W3), dtype=jnp.float32)
    out3 = jax.block_until_ready(group_max_projection(x3, group_size=group_size))
    ref3 = jnp.max(x3.reshape(B3, group_size, C3 // group_size, H3, W3), axis=1)
    assert jnp.allclose(out3, ref3), "mismatch vs reference (flattened layout)"

    print("KERNEL_OK")
</pallas_src>

<mosaic_0001>
module attributes {stable_mosaic.version = 11 : i64} {
  func.func @_group_max_kernel(%arg0: i32, %arg1: i32, %arg2: i32, %arg3: memref<2x4x1x256xf32, #tpu.memory_space<vmem>>, %arg4: memref<2x1x256xf32, #tpu.memory_space<vmem>>) attributes {dimension_semantics = [#tpu.dimension_semantics<parallel>, #tpu.dimension_semantics<parallel>, #tpu.dimension_semantics<parallel>], iteration_bounds = array<i64: 1, 1, 1>, scalar_prefetch = 0 : i64, scratch_operands = 0 : i64, tpu.core_type = #tpu.core_type<tc>, window_params = [{transform_indices = @transform_0, window_bounds = array<i64: 2, 4, 1, 256>}, {transform_indices = @transform_1, window_bounds = array<i64: 2, 1, 256>}]} {
    %c0 = arith.constant 0 : index
    %c0_0 = arith.constant 0 : index
    %c0_1 = arith.constant 0 : index
    %c0_2 = arith.constant 0 : index
    %0 = vector.load %arg3[%c0, %c0_0, %c0_1, %c0_2] : memref<2x4x1x256xf32, #tpu.memory_space<vmem>>, vector<2x4x1x256xf32>
    %cst = arith.constant dense<0xFF800000> : vector<2x1x256xf32>
    %1 = vector.multi_reduction <maximumf>, %0, %cst [1] : vector<2x4x1x256xf32> to vector<2x1x256xf32>
    %c0_3 = arith.constant 0 : index
    %c0_4 = arith.constant 0 : index
    %c0_5 = arith.constant 0 : index
    %2 = vector.load %arg4[%c0_3, %c0_4, %c0_5] : memref<2x1x256xf32, #tpu.memory_space<vmem>>, vector<2x1x256xf32>
    tpu.vector_store %arg4[%c0_3, %c0_4, %c0_5], %1 {strides = array<i32>} : memref<2x1x256xf32, #tpu.memory_space<vmem>>, vector<2x1x256xf32>,
    return
  }
  func.func @transform_0(%arg0: i32, %arg1: i32, %arg2: i32) -> (i32, i32, i32, i32) {
    %c0_i32 = arith.constant 0 : i32
    %c0_i32_0 = arith.constant 0 : i32
    return %arg0, %c0_i32, %arg1, %arg2 : i32, i32, i32, i32
  }
  func.func @transform_1(%arg0: i32, %arg1: i32, %arg2: i32) -> (i32, i32, i32) {
    %c0_i32 = arith.constant 0 : i32
    return %arg0, %arg1, %arg2 : i32, i32, i32
  }
}

</mosaic_0001>

<llo_original>
// kernel: tpu_custom_call.1
$region0: #{tpu_custom_call.1}
  #allocation0 [shape = 'u32[]', space=smem, size = 0x4, offset = 0x4, fixed_abs, tag = 'smem constant byte address 0x4 - core index']
  #allocation1 [shape = 'u32[144,128]{1,0:T(1,128)}', space=vmem, size = 0x12000, scoped, tag = 'internal scratch']
  %s0 = inlined_call_operand.hbm [shape: f32[2,4,1,256], index: 0, kind: input, shape index: {}]
  %s1 = inlined_call_operand.hbm [shape: f32[2,1,256], index: 1, kind: output, shape index: {}]
  %s2 = sld [smem:[#allocation0]]
  $region18: #{tpu_custom_call.1} parent=0
    _
  %s4 = ssub.s32 1, %s2
  %s5 = scalar_select 0, %s4, %s2
  $region1: #{tpu_custom_call.1} parent=0
    #allocation2 [shape = 'u8[8192]{0}', space=vmem, size = 0x2000, scoped, tag = 'input window, operand 0, single buffered']
    #allocation3 [shape = 's32[1]{0}', space=sflag, size = 0x4, scoped, tag = 'scoped memory for tpu_custom_call.1']
    #allocation4 [shape = 's32[1]{0}', space=sflag, size = 0x4, scoped, tag = 'scoped memory for tpu_custom_call.1']
    #allocation5 [shape = 'u8[2048]{0}', space=vmem, size = 0x800, scoped, tag = 'output window, operand 0, single buffered']
    %6 = vsyncpa [#allocation3], 0
    %7 = vsyncpa [#allocation4], 0
    // Predicated region
    $region2: #{tpu_custom_call.1} parent=1 // pred_check
      _
    $region3: #{tpu_custom_call.1} parent=1 // pred_check_branch
      %9 = sbr.rel (0) target = $region5
    $region4: #{tpu_custom_call.1} parent=1 // pred_region
      %s11 = ssub.s32 256, 256
      %12 = vsyncadd [#allocation3], %s11
      %s13 = sshll.u32 [#allocation2], 4
      %s14 = int_to_ptr.vmem [resolvable:$true] %s13
      %19 = dma.hbm_to_vmem [thread:$0]  %s0, 256, %s14, [#allocation3], 32, 32, 2
    $region5: #{tpu_custom_call.1} parent=1 // pred_fallthru
      _
    // Predicated region
    $region6: #{tpu_custom_call.1} parent=1 // pred_check
      _
    $region7: #{tpu_custom_call.1} parent=1 // pred_check_branch
      %21 = sbr.rel (0) target = $region9
    $region8: #{tpu_custom_call.1} parent=1 // pred_region
      %22 = dma.done [#allocation3], 256
    $region9: #{tpu_custom_call.1} parent=1 // pred_fallthru
      _
    %v23 = vld [vmem:[#allocation2] sm:$0x3]
    %v24 = vld [vmem:[#allocation2 + $0x2] sm:$0x3]
    %v25 = vld [vmem:[#allocation2 + $0x4] sm:$0x3]
    %v26 = vld [vmem:[#allocation2 + $0x6] sm:$0x3]
    %v27 = vld [vmem:[#allocation2 + $0x8] sm:$0x3]
    %v28 = vld [vmem:[#allocation2 + $0xa] sm:$0x3]
    %v29 = vld [vmem:[#allocation2 + $0xc] sm:$0x3]
    %v30 = vld [vmem:[#allocation2 + $0xe] sm:$0x3]
    %v31 = vlaneseq
    %vm32 = vcmp.ge.s32.totalorder %v31, 0
    %vm33 = vcmp.lt.s32.totalorder %v31, 256
    %vm34 = vmand %vm32, %vm33
    %v35 = vsel %vm34, %v23, -inf
    %v36 = vsel %vm34, %v24, -inf
    %v37 = vsel %vm34, %v25, -inf
    %v38 = vmax.f32 %v35, %v37
    %v39 = vsel %vm34, %v26, -inf
    %v40 = vmax.f32 %v36, %v39
    %v41 = vmax.f32 %v38, %v40
    %v42 = vsel %vm34, %v27, -inf
    %v43 = vsel %vm34, %v28, -inf
    %v44 = vsel %vm34, %v29, -inf
    %v45 = vmax.f32 %v42, %v44
    %v46 = vsel %vm34, %v30, -inf
    %v47 = vmax.f32 %v43, %v46
    %v48 = vmax.f32 %v45, %v47
    %49 = vst.msk [vmem:[#allocation5] sm:$0x3] %vm34, %v41
    %50 = vst.msk [vmem:[#allocation5 + $0x2] sm:$0x3] %vm34, %v48
    // Predicated region
    $region10: #{tpu_custom_call.1} parent=1 // pred_check
      _
    $region11: #{tpu_custom_call.1} parent=1 // pred_check_branch
      %52 = sbr.rel (0) target = $region13
    $region12: #{tpu_custom_call.1} parent=1 // pred_region
      %s54 = ssub.s32 64, 64
      %55 = vsyncadd [#allocation4], %s54
      %s56 = sshll.u32 [#allocation5], 4
      %s57 = int_to_ptr.vmem [resolvable:$true] %s56
      %62 = dma.vmem_to_hbm [thread:$0]  %s57, 64, %s1, [#allocation4], 32, 32, 2
    $region13: #{tpu_custom_call.1} parent=1 // pred_fallthru
      _
    // Predicated region
    $region14: #{tpu_custom_call.1} parent=1 // pred_check
      _
    $region15: #{tpu_custom_call.1} parent=1 // pred_check_branch
      %64 = sbr.rel (0) target = $region17
    $region16: #{tpu_custom_call.1} parent=1 // pred_region
      %65 = dma.done [#allocation4], 64
    $region17: #{tpu_custom_call.1} parent=1 // pred_fallthru
      _
    %66 = vsyncpa [#allocation3], 1
    %67 = vsyncpa [#allocation4], 1

</llo_original>
